<compile_context>
chip_gen: v7x
topology: tpu7x:2x2x1
jax: 0.10.0
libtpu: 0.0.40
codegen_flags: <defaults>
</compile_context>

<pallas_src>
import jax
import jax.numpy as jnp
from jax.experimental import pallas as pl
from jax.experimental.pallas import tpu as pltpu


def _round_up(v, m):
    return ((v + m - 1) // m) * m


# Batch (M) tile once B is large enough to be worth pipelining / megacore
# sharding.  256 fills the 2x256 MXU on v6e/v7x; v5e (4x128) is also happy.
_TILE_B = 256


def hat_mlp_kernel(t_ref, x_ref, w1_ref, b1_ref, w2_ref, b2_ref,
                   e_ref, wl_ref, bl_ref, s_ref, y_ref, g_ref):
    """Fused HAT-MLP forward for one batch tile (bf16 MXU, f32 accumulate).

    t_ref : (1,)       SMEM  scalar-prefetched task index (drives e_ref index_map)
    x_ref : (Bk, Dp)   f32   flattened input tile (cast to bf16 in-kernel)
    w1_ref: (Dp, Hp)   bf16  fc1.weight.T         b1_ref: (1, Hp) f32
    w2_ref: (Hp, Hp)   bf16  fc2.weight.T         b2_ref: (1, Hp) f32
    e_ref : (1, 2, Hp) f32   [efc1[t]; efc2[t]]   (row gather via index_map)
    wl_ref: (Hp, Np)   bf16  all task heads packed along lanes
    bl_ref: (1, Np)    f32   packed head biases
    s_ref : (1,)       f32   SMEM HAT temperature (no recompile when annealed)
    y_ref : (Bk, Np)   f32   packed logits (lane-dense store)
    g_ref : (1, 2, Hp) f32   [gfc1; gfc2] (per-tile copy -> no parallel write aliasing)
    """
    del t_ref  # consumed by e_ref's index_map

    s = s_ref[0]

    # --- HAT gates: gfc = sigmoid(s * efc(t)), f32 on the EUP ---
    gates = jax.nn.sigmoid(s * e_ref[...])            # (1, 2, Hp)
    g_ref[...] = gates
    g1 = gates[0, 0:1, :]                             # (1, Hp)
    g2 = gates[0, 1:2, :]                             # (1, Hp)

    # --- layer 1: h = relu(fc1(x) + b1) * gfc1   (dropout = identity) ---
    h = jnp.dot(x_ref[...].astype(jnp.bfloat16), w1_ref[...],
                preferred_element_type=jnp.float32)
    h = jnp.maximum(h + b1_ref[...], 0.0) * g1        # (Bk, Hp) f32

    # --- layer 2: h = relu(fc2(h) + b2) * gfc2 ---
    h = jnp.dot(h.astype(jnp.bfloat16), w2_ref[...],
                preferred_element_type=jnp.float32)
    h = jnp.maximum(h + b2_ref[...], 0.0) * g2        # (Bk, Hp) f32

    # --- all task heads in one lane-dense matmul ---
    y = jnp.dot(h.astype(jnp.bfloat16), wl_ref[...],
                preferred_element_type=jnp.float32)
    y_ref[...] = y + bl_ref[...]                      # (Bk, Np) f32
    # TODO(synk): store y as bf16 if downstream tolerates it (halves writeback).


def prepare_params(params):
    """One-time layout prep: pad / transpose / bf16-cast every weight into its
    on-device kernel layout.  Call ONCE and reuse the returned pytree for every
    forward — rebuilding these per call re-reads/writes all weights in HBM and
    dominates wall clock at realistic HAT sizes."""
    w1, b1 = params["w1"], params["b1"]                # (D, H), (H,)
    w2, b2 = params["w2"], params["b2"]                # (H, H), (H,)
    e1, e2 = params["e1"], params["e2"]                # (T, H), (T, H)
    wl, bl = params["wl"], params["bl"]                # (T, H, n), (T, n)
    D, H = w1.shape
    T, _, n = wl.shape
    N = T * n

    # (8,128) vreg granules.  At realistic sizes (H~2000) these already round
    # to multiples of 256, filling the wider v6e/v7x MXU.
    Dp = _round_up(D, 128)
    Hp = _round_up(H, 128)
    Np = _round_up(N, 128)

    w1_p = jnp.zeros((Dp, Hp), jnp.bfloat16).at[:D, :H].set(w1.astype(jnp.bfloat16))
    b1_p = jnp.zeros((1, Hp), jnp.float32).at[0, :H].set(b1)
    w2_p = jnp.zeros((Hp, Hp), jnp.bfloat16).at[:H, :H].set(w2.astype(jnp.bfloat16))
    b2_p = jnp.zeros((1, Hp), jnp.float32).at[0, :H].set(b2)
    # stacked task embeddings: (T, 2, Hp); one SMEM-indexed block pulls both rows of task t
    e_stack = (jnp.zeros((T, 2, Hp), jnp.float32)
               .at[:, 0, :H].set(e1)
               .at[:, 1, :H].set(e2))
    # all heads packed along lanes: (Hp, Np)
    wl_flat = wl.transpose(1, 0, 2).reshape(H, N)
    wl_p = jnp.zeros((Hp, Np), jnp.bfloat16).at[:H, :N].set(wl_flat.astype(jnp.bfloat16))
    bl_p = jnp.zeros((1, Np), jnp.float32).at[0, :N].set(bl.reshape(N))

    prepared = dict(w1=w1_p, b1=b1_p, w2=w2_p, b2=b2_p, e=e_stack, wl=wl_p, bl=bl_p)
    meta = dict(D=D, H=H, T=T, n=n, N=N, Dp=Dp, Hp=Hp, Np=Np)
    return prepared, meta


def hat_mlp_forward(t, x, prepared, meta, s=1.0):
    """Reproduces Net.forward(t, x, s) for nlayers=2 (eval mode).

    Returns (y, masks): y is a list of per-task logits (each (B, n)),
    masks = [gfc1, gfc2] each of shape (H,).
    """
    D, H, T, n, N = meta["D"], meta["H"], meta["T"], meta["n"], meta["N"]
    Dp, Hp, Np = meta["Dp"], meta["Hp"], meta["Np"]

    B = x.shape[0]
    xf = x.reshape(B, -1).astype(jnp.float32)          # x.view(x.size(0), -1), stays f32
    assert xf.shape[1] == D

    # Only pad what a (8,128)-legal block cannot cover.
    if D != Dp:
        xf = jnp.pad(xf, ((0, 0), (0, Dp - D)))
    if B > _TILE_B:
        Bk = _TILE_B
        Bp = _round_up(B, Bk)
        if Bp != B:
            xf = jnp.pad(xf, ((0, Bp - B), (0, 0)))
    else:
        Bk, Bp = B, B                                  # full-extent block, no padding
    num_b = Bp // Bk

    t_arr = jnp.asarray([t], dtype=jnp.int32)          # scalar-prefetch task index
    s_arr = jnp.asarray([s], dtype=jnp.float32)        # SMEM scalar (no recompile on anneal)

    grid_spec = pltpu.PrefetchScalarGridSpec(
        num_scalar_prefetch=1,
        grid=(num_b,),
        in_specs=[
            pl.BlockSpec((Bk, Dp), lambda i, t_ref: (i, 0)),              # x tile
            pl.BlockSpec((Dp, Hp), lambda i, t_ref: (0, 0)),              # w1 (resident)
            pl.BlockSpec((1, Hp), lambda i, t_ref: (0, 0)),               # b1
            pl.BlockSpec((Hp, Hp), lambda i, t_ref: (0, 0)),              # w2 (resident)
            pl.BlockSpec((1, Hp), lambda i, t_ref: (0, 0)),               # b2
            pl.BlockSpec((1, 2, Hp), lambda i, t_ref: (t_ref[0], 0, 0)),  # efc rows of task t
            pl.BlockSpec((Hp, Np), lambda i, t_ref: (0, 0)),              # packed heads (resident)
            pl.BlockSpec((1, Np), lambda i, t_ref: (0, 0)),               # packed head biases
            pl.BlockSpec(memory_space=pltpu.MemorySpace.SMEM),            # s
        ],
        out_specs=[
            pl.BlockSpec((Bk, Np), lambda i, t_ref: (i, 0)),              # packed logits
            pl.BlockSpec((1, 2, Hp), lambda i, t_ref: (i, 0, 0)),         # gates (per tile)
        ],
    )

    # Advisory cost estimate so XLA schedules surrounding ops around the call.
    flops = 2 * Bp * (Dp * Hp + Hp * Hp + Hp * Np)
    bytes_accessed = (4 * Bp * Dp                      # x (f32 in)
                      + 2 * (Dp * Hp + Hp * Hp + Hp * Np)   # bf16 weights
                      + 4 * (Hp + Hp + 2 * Hp + Np)         # biases + efc rows
                      + 4 * Bp * Np + 4 * num_b * 2 * Hp)   # outputs
    cost = pl.CostEstimate(flops=flops, transcendentals=2 * Hp,
                           bytes_accessed=bytes_accessed)

    # Scoped-VMEM budget derived from the actual blocks (double-buffered) plus
    # margin — v7x only has 64 MiB physical VMEM, so don't assume 128 MiB.
    block_bytes = (4 * Bk * Dp + 2 * Dp * Hp + 2 * Hp * Hp + 2 * Hp * Np
                   + 4 * (Hp + Hp + 2 * Hp + Np) + 4 * Bk * Np + 4 * 2 * Hp)
    vmem_limit = int(min(max(2 * block_bytes + (8 << 20), 32 << 20), 96 << 20))

    y_pad, g_pad = pl.pallas_call(
        hat_mlp_kernel,
        grid_spec=grid_spec,
        out_shape=[
            jax.ShapeDtypeStruct((Bp, Np), jnp.float32),
            jax.ShapeDtypeStruct((num_b, 2, Hp), jnp.float32),
        ],
        compiler_params=pltpu.CompilerParams(
            dimension_semantics=("parallel",),          # batch tiles -> both v7x TCs
            vmem_limit_bytes=vmem_limit),
        cost_estimate=cost,
    )(t_arr, xf, prepared["w1"], prepared["b1"], prepared["w2"], prepared["b2"],
      prepared["e"], prepared["wl"], prepared["bl"], s_arr)

    y_flat = y_pad[:B, :N]
    ys = [y_flat[:, tt * n:(tt + 1) * n] for tt in range(T)]   # per-task (B, n)
    masks = [g_pad[0, 0, :H], g_pad[0, 1, :H]]                 # [gfc1, gfc2], each (H,)
    return ys, masks


def init_params(key, D, H, T, n):
    """Deterministic synthetic parameters matching the module's shapes."""
    ks = jax.random.split(key, 8)
    # fc weights stored transposed: (in, out)
    w1 = jax.random.uniform(ks[0], (D, H), jnp.float32, -0.05, 0.05)
    b1 = jax.random.uniform(ks[1], (H,), jnp.float32, -0.05, 0.05)
    w2 = jax.random.uniform(ks[2], (H, H), jnp.float32, -0.1, 0.1)
    b2 = jax.random.uniform(ks[3], (H,), jnp.float32, -0.1, 0.1)
    # task embeddings efc1 / efc2: (num_tasks, nhid)
    e1 = jax.random.normal(ks[4], (T, H), jnp.float32)
    e2 = jax.random.normal(ks[5], (T, H), jnp.float32)
    # per-task heads, stacked: (T, H, n) and (T, n)
    wl = jax.random.uniform(ks[6], (T, H, n), jnp.float32, -0.1, 0.1)
    bl = jax.random.uniform(ks[7], (T, n), jnp.float32, -0.1, 0.1)
    return dict(w1=w1, b1=b1, w2=w2, b2=b2, e1=e1, e2=e2, wl=wl, bl=bl)


if __name__ == "__main__":
    # Small shapes consistent with the module: inputsize=(4, 16, 16), nhid=32,
    # taskcla = [(0, 10), (1, 10)], batch=2, nlayers=2.
    B, C, S = 2, 4, 16
    H = 32
    taskcla = [(0, 10), (1, 10)]
    T = len(taskcla)
    n_classes = taskcla[0][1]
    D = C * S * S

    key = jax.random.PRNGKey(0)
    k_x, k_p = jax.random.split(key)
    x = jax.random.normal(k_x, (B, C, S, S), jnp.float32)   # NCHW input
    params = init_params(k_p, D, H, T, n_classes)

    # One-time layout prep (padding / transposes / bf16 casts happen here, not per call).
    prepared, meta = prepare_params(params)
    jax.block_until_ready(prepared)

    task_idx = 1
    s_temp = 1.0
    ys, masks = hat_mlp_forward(task_idx, x, prepared, meta, s=s_temp)

    jax.block_until_ready(ys)
    jax.block_until_ready(masks)

    # Sanity check against a pure-JAX f32 reference of the same math.
    xf = x.reshape(B, -1)
    g1_ref = jax.nn.sigmoid(s_temp * params["e1"][task_idx])
    g2_ref = jax.nn.sigmoid(s_temp * params["e2"][task_idx])
    h_ref = jnp.maximum(xf @ params["w1"] + params["b1"], 0.0) * g1_ref
    h_ref = jnp.maximum(h_ref @ params["w2"] + params["b2"], 0.0) * g2_ref
    y_ref = [h_ref @ params["wl"][t] + params["bl"][t] for t in range(T)]

    # bf16 matmul operands (f32 accumulation) => loosened tolerance on logits.
    for a, b in zip(ys, y_ref):
        assert jnp.allclose(a, b, atol=2e-2, rtol=2e-2), "head mismatch"
    assert jnp.allclose(masks[0], g1_ref, atol=1e-5), "gate1 mismatch"
    assert jnp.allclose(masks[1], g2_ref, atol=1e-5), "gate2 mismatch"

    print("KERNEL_OK")
</pallas_src>

<mosaic_0001>
module attributes {stable_mosaic.version = 11 : i64} {
  func.func @hat_mlp_kernel(%arg0: i32, %arg1: memref<1xi32, #tpu.memory_space<smem>>, %arg2: memref<2x1024xf32, #tpu.memory_space<vmem>>, %arg3: memref<1024x128xbf16, #tpu.memory_space<vmem>>, %arg4: memref<1x128xf32, #tpu.memory_space<vmem>>, %arg5: memref<128x128xbf16, #tpu.memory_space<vmem>>, %arg6: memref<1x128xf32, #tpu.memory_space<vmem>>, %arg7: memref<1x2x128xf32, #tpu.memory_space<vmem>>, %arg8: memref<128x128xbf16, #tpu.memory_space<vmem>>, %arg9: memref<1x128xf32, #tpu.memory_space<vmem>>, %arg10: memref<1xf32, #tpu.memory_space<smem>>, %arg11: memref<2x128xf32, #tpu.memory_space<vmem>>, %arg12: memref<1x2x128xf32, #tpu.memory_space<vmem>>) attributes {dimension_semantics = [#tpu.dimension_semantics<parallel>], iteration_bounds = array<i64: 1>, scalar_prefetch = 1 : i64, scratch_operands = 0 : i64, tpu.core_type = #tpu.core_type<tc>, window_params = [{transform_indices = @transform_0, window_bounds = array<i64: 2, 1024>}, {pipeline_mode = #tpu.pipeline_mode<synchronous>, transform_indices = @transform_1, window_bounds = array<i64: 1024, 128>}, {pipeline_mode = #tpu.pipeline_mode<synchronous>, transform_indices = @transform_2, window_bounds = array<i64: 1, 128>}, {pipeline_mode = #tpu.pipeline_mode<synchronous>, transform_indices = @transform_3, window_bounds = array<i64: 128, 128>}, {pipeline_mode = #tpu.pipeline_mode<synchronous>, transform_indices = @transform_4, window_bounds = array<i64: 1, 128>}, {transform_indices = @transform_5, window_bounds = array<i64: 1, 2, 128>}, {pipeline_mode = #tpu.pipeline_mode<synchronous>, transform_indices = @transform_6, window_bounds = array<i64: 128, 128>}, {pipeline_mode = #tpu.pipeline_mode<synchronous>, transform_indices = @transform_7, window_bounds = array<i64: 1, 128>}, {transform_indices = @transform_8, window_bounds = array<i64: 1>}, {transform_indices = @transform_9, window_bounds = array<i64: 2, 128>}, {transform_indices = @transform_10, window_bounds = array<i64: 1, 2, 128>}]} {
    %c0 = arith.constant 0 : index
    %0 = memref.load %arg10[%c0] : memref<1xf32, #tpu.memory_space<smem>>
    %c0_0 = arith.constant 0 : index
    %c0_1 = arith.constant 0 : index
    %c0_2 = arith.constant 0 : index
    %1 = vector.load %arg7[%c0_0, %c0_1, %c0_2] : memref<1x2x128xf32, #tpu.memory_space<vmem>>, vector<1x2x128xf32>
    %2 = vector.broadcast %0 : f32 to vector<1x2x128xf32>
    %3 = arith.mulf %2, %1 : vector<1x2x128xf32>
    %4 = arith.negf %3 : vector<1x2x128xf32>
    %5 = math.exp %4 : vector<1x2x128xf32>
    %cst = arith.constant 1.000000e+00 : f32
    %6 = vector.broadcast %cst : f32 to vector<1x2x128xf32>
    %7 = arith.addf %6, %5 : vector<1x2x128xf32>
    %8 = arith.divf %6, %7 : vector<1x2x128xf32>
    %c0_3 = arith.constant 0 : index
    %c0_4 = arith.constant 0 : index
    %c0_5 = arith.constant 0 : index
    %9 = vector.load %arg12[%c0_3, %c0_4, %c0_5] : memref<1x2x128xf32, #tpu.memory_space<vmem>>, vector<1x2x128xf32>
    tpu.vector_store %arg12[%c0_3, %c0_4, %c0_5], %8 {strides = array<i32>} : memref<1x2x128xf32, #tpu.memory_space<vmem>>, vector<1x2x128xf32>,
    %10 = vector.extract_strided_slice %8 {offsets = [0, 0, 0], sizes = [1, 1, 128], strides = [1, 1, 1]} : vector<1x2x128xf32> to vector<1x1x128xf32>
    %11 = vector.shape_cast %10 : vector<1x1x128xf32> to vector<1x128xf32>
    %12 = vector.extract_strided_slice %8 {offsets = [0, 1, 0], sizes = [1, 1, 128], strides = [1, 1, 1]} : vector<1x2x128xf32> to vector<1x1x128xf32>
    %13 = vector.shape_cast %12 : vector<1x1x128xf32> to vector<1x128xf32>
    %c0_6 = arith.constant 0 : index
    %c0_7 = arith.constant 0 : index
    %14 = vector.load %arg2[%c0_6, %c0_7] : memref<2x1024xf32, #tpu.memory_space<vmem>>, vector<2x1024xf32>
    %15 = arith.truncf %14 : vector<2x1024xf32> to vector<2x1024xbf16>
    %c0_8 = arith.constant 0 : index
    %c0_9 = arith.constant 0 : index
    %16 = vector.load %arg3[%c0_8, %c0_9] : memref<1024x128xbf16, #tpu.memory_space<vmem>>, vector<1024x128xbf16>
    %cst_10 = arith.constant dense<0.000000e+00> : vector<2x128xf32>
    %17 = tpu.matmul %15, %16, %cst_10 {dimension_numbers = #tpu.dot_dimension_numbers<[1], [0], [0], [1], [0, 0, 1, 1], [], []>} : vector<2x1024xbf16>, vector<1024x128xbf16>, vector<2x128xf32> -> vector<2x128xf32>
    %c0_11 = arith.constant 0 : index
    %c0_12 = arith.constant 0 : index
    %18 = vector.load %arg4[%c0_11, %c0_12] : memref<1x128xf32, #tpu.memory_space<vmem>>, vector<1x128xf32>
    %19 = vector.broadcast %18 : vector<1x128xf32> to vector<2x128xf32>
    %20 = arith.addf %17, %19 : vector<2x128xf32>
    %cst_13 = arith.constant 0.000000e+00 : f32
    %21 = vector.broadcast %cst_13 : f32 to vector<2x128xf32>
    %22 = arith.maximumf %20, %21 : vector<2x128xf32>
    %23 = vector.broadcast %11 : vector<1x128xf32> to vector<2x128xf32>
    %24 = arith.mulf %22, %23 : vector<2x128xf32>
    %25 = arith.truncf %24 : vector<2x128xf32> to vector<2x128xbf16>
    %c0_14 = arith.constant 0 : index
    %c0_15 = arith.constant 0 : index
    %26 = vector.load %arg5[%c0_14, %c0_15] : memref<128x128xbf16, #tpu.memory_space<vmem>>, vector<128x128xbf16>
    %cst_16 = arith.constant dense<0.000000e+00> : vector<2x128xf32>
    %27 = tpu.matmul %25, %26, %cst_16 {dimension_numbers = #tpu.dot_dimension_numbers<[1], [0], [0], [1], [0, 0, 1, 1], [], []>} : vector<2x128xbf16>, vector<128x128xbf16>, vector<2x128xf32> -> vector<2x128xf32>
    %c0_17 = arith.constant 0 : index
    %c0_18 = arith.constant 0 : index
    %28 = vector.load %arg6[%c0_17, %c0_18] : memref<1x128xf32, #tpu.memory_space<vmem>>, vector<1x128xf32>
    %29 = vector.broadcast %28 : vector<1x128xf32> to vector<2x128xf32>
    %30 = arith.addf %27, %29 : vector<2x128xf32>
    %cst_19 = arith.constant 0.000000e+00 : f32
    %31 = vector.broadcast %cst_19 : f32 to vector<2x128xf32>
    %32 = arith.maximumf %30, %31 : vector<2x128xf32>
    %33 = vector.broadcast %13 : vector<1x128xf32> to vector<2x128xf32>
    %34 = arith.mulf %32, %33 : vector<2x128xf32>
    %35 = arith.truncf %34 : vector<2x128xf32> to vector<2x128xbf16>
    %c0_20 = arith.constant 0 : index
    %c0_21 = arith.constant 0 : index
    %36 = vector.load %arg8[%c0_20, %c0_21] : memref<128x128xbf16, #tpu.memory_space<vmem>>, vector<128x128xbf16>
    %cst_22 = arith.constant dense<0.000000e+00> : vector<2x128xf32>
    %37 = tpu.matmul %35, %36, %cst_22 {dimension_numbers = #tpu.dot_dimension_numbers<[1], [0], [0], [1], [0, 0, 1, 1], [], []>} : vector<2x128xbf16>, vector<128x128xbf16>, vector<2x128xf32> -> vector<2x128xf32>
    %c0_23 = arith.constant 0 : index
    %c0_24 = arith.constant 0 : index
    %38 = vector.load %arg9[%c0_23, %c0_24] : memref<1x128xf32, #tpu.memory_space<vmem>>, vector<1x128xf32>
    %39 = vector.broadcast %38 : vector<1x128xf32> to vector<2x128xf32>
    %40 = arith.addf %37, %39 : vector<2x128xf32>
    %c0_25 = arith.constant 0 : index
    %c0_26 = arith.constant 0 : index
    %41 = vector.load %arg11[%c0_25, %c0_26] : memref<2x128xf32, #tpu.memory_space<vmem>>, vector<2x128xf32>
    tpu.vector_store %arg11[%c0_25, %c0_26], %40 {strides = array<i32>} : memref<2x128xf32, #tpu.memory_space<vmem>>, vector<2x128xf32>,
    return
  }
  func.func @transform_0(%arg0: i32, %arg1: memref<1xi32, #tpu.memory_space<smem>>) -> (i32, i32) {
    %c0_i32 = arith.constant 0 : i32
    %c0_i32_0 = arith.constant 0 : i32
    return %arg0, %c0_i32 : i32, i32
  }
  func.func @transform_1(%arg0: i32, %arg1: memref<1xi32, #tpu.memory_space<smem>>) -> (i32, i32) {
    %c0_i32 = arith.constant 0 : i32
    %c0_i32_0 = arith.constant 0 : i32
    %c0_i32_1 = arith.constant 0 : i32
    return %c0_i32, %c0_i32_0 : i32, i32
  }
  func.func @transform_2(%arg0: i32, %arg1: memref<1xi32, #tpu.memory_space<smem>>) -> (i32, i32) {
    %c0_i32 = arith.constant 0 : i32
    %c0_i32_0 = arith.constant 0 : i32
    %c0_i32_1 = arith.constant 0 : i32
    return %c0_i32, %c0_i32_0 : i32, i32
  }
  func.func @transform_3(%arg0: i32, %arg1: memref<1xi32, #tpu.memory_space<smem>>) -> (i32, i32) {
    %c0_i32 = arith.constant 0 : i32
    %c0_i32_0 = arith.constant 0 : i32
    %c0_i32_1 = arith.constant 0 : i32
    return %c0_i32, %c0_i32_0 : i32, i32
  }
  func.func @transform_4(%arg0: i32, %arg1: memref<1xi32, #tpu.memory_space<smem>>) -> (i32, i32) {
    %c0_i32 = arith.constant 0 : i32
    %c0_i32_0 = arith.constant 0 : i32
    %c0_i32_1 = arith.constant 0 : i32
    return %c0_i32, %c0_i32_0 : i32, i32
  }
  func.func @transform_5(%arg0: i32, %arg1: memref<1xi32, #tpu.memory_space<smem>>) -> (i32, i32, i32) {
    %c0 = arith.constant 0 : index
    %0 = memref.load %arg1[%c0] : memref<1xi32, #tpu.memory_space<smem>>
    %c0_i32 = arith.constant 0 : i32
    %c0_i32_0 = arith.constant 0 : i32
    %c0_i32_1 = arith.constant 0 : i32
    return %0, %c0_i32, %c0_i32_0 : i32, i32, i32
  }
  func.func @transform_6(%arg0: i32, %arg1: memref<1xi32, #tpu.memory_space<smem>>) -> (i32, i32) {
    %c0_i32 = arith.constant 0 : i32
    %c0_i32_0 = arith.constant 0 : i32
    %c0_i32_1 = arith.constant 0 : i32
    return %c0_i32, %c0_i32_0 : i32, i32
  }
  func.func @transform_7(%arg0: i32, %arg1: memref<1xi32, #tpu.memory_space<smem>>) -> (i32, i32) {
    %c0_i32 = arith.constant 0 : i32
    %c0_i32_0 = arith.constant 0 : i32
    %c0_i32_1 = arith.constant 0 : i32
    return %c0_i32, %c0_i32_0 : i32, i32
  }
  func.func @transform_8(%arg0: i32, %arg1: memref<1xi32, #tpu.memory_space<smem>>) -> i32 {
    %c0_i32 = arith.constant 0 : i32
    %c0_i32_0 = arith.constant 0 : i32
    return %c0_i32 : i32
  }
  func.func @transform_9(%arg0: i32, %arg1: memref<1xi32, #tpu.memory_space<smem>>) -> (i32, i32) {
    %c0_i32 = arith.constant 0 : i32
    %c0_i32_0 = arith.constant 0 : i32
    return %arg0, %c0_i32 : i32, i32
  }
  func.func @transform_10(%arg0: i32, %arg1: memref<1xi32, #tpu.memory_space<smem>>) -> (i32, i32, i32) {
    %c0_i32 = arith.constant 0 : i32
    %c0_i32_0 = arith.constant 0 : i32
    %c0_i32_1 = arith.constant 0 : i32
    return %arg0, %c0_i32, %c0_i32_0 : i32, i32, i32
  }
}

</mosaic_0001>

<llo_original>
// kernel: tpu_custom_call.1
$region0: #{tpu_custom_call.1}
  #allocation0 [shape = 'u32[]', space=smem, size = 0x4, offset = 0x4, fixed_abs, tag = 'smem constant byte address 0x4 - core index']
  #allocation1 [shape = 'u32[144,128]{1,0:T(1,128)}', space=vmem, size = 0x12000, scoped, tag = 'internal scratch']
  #allocation2 [shape = 's32[1]{0}', space=sflag, size = 0x4, scoped, tag = 'scoped memory for tpu_custom_call.1']
  #allocation3 [shape = 's32[1]{0:T(128)S(6)}', space=smem, size = 0x200, scoped, tag = 'prefetched SMEM operand 0']
  #allocation4 [shape = 'f32[1]{0:T(128)S(6)}', space=smem, size = 0x200, scoped, tag = 'scoped memory for tpu_custom_call.1']
  %s0 = inlined_call_operand.<no memory space> [shape: s32[1], index: 0, kind: input, shape index: {}]
  %s1 = inlined_call_operand.hbm [shape: f32[2,1024], index: 1, kind: input, shape index: {}]
  %s2 = inlined_call_operand.hbm [shape: bf16[1024,128], index: 2, kind: input, shape index: {}]
  %s3 = inlined_call_operand.vmem [shape: f32[1,128], index: 3, kind: input, shape index: {}]
  %s4 = inlined_call_operand.hbm [shape: bf16[128,128], index: 4, kind: input, shape index: {}]
  %s5 = inlined_call_operand.vmem [shape: f32[1,128], index: 5, kind: input, shape index: {}]
  %s6 = inlined_call_operand.vmem [shape: f32[2,2,128], index: 6, kind: input, shape index: {}]
  %s7 = inlined_call_operand.hbm [shape: bf16[128,128], index: 7, kind: input, shape index: {}]
  %s8 = inlined_call_operand.vmem [shape: f32[1,128], index: 8, kind: input, shape index: {}]
  %s9 = inlined_call_operand.<no memory space> [shape: f32[1], index: 9, kind: input, shape index: {}]
  %s10 = inlined_call_operand.hbm [shape: f32[2,128], index: 10, kind: output, shape index: {0}]
  %s11 = inlined_call_operand.hbm [shape: f32[1,2,128], index: 11, kind: output, shape index: {1}]
  %12 = xla_tuple %s10, %s11
  %s13 = sld [smem:[#allocation0]]
  $region70: #{tpu_custom_call.1} parent=0
    _
  %s15 = ssub.s32 1, %s13
  %s16 = scalar_select 0, %s15, %s13
  %17 = sst [smem:[#allocation3]] %s0
  %18 = sst [smem:[#allocation4]] %s9
  $region1: #{tpu_custom_call.1} parent=0
    #allocation5 [shape = 'u8[8192]{0}', space=vmem, size = 0x2000, scoped, tag = 'input window, operand 1, single buffered']
    #allocation6 [shape = 's32[1]{0}', space=sflag, size = 0x4, scoped, tag = 'scoped memory for tpu_custom_call.1']
    #allocation7 [shape = 's32[1]{0}', space=sflag, size = 0x4, scoped, tag = 'scoped memory for tpu_custom_call.1']
    #allocation8 [shape = 'u8[262144]{0}', space=vmem, size = 0x40000, scoped, tag = 'input window, operand 2, single buffered']
    #allocation9 [shape = 's32[1]{0}', space=sflag, size = 0x4, scoped, tag = 'scoped memory for tpu_custom_call.1']
    #allocation10 [shape = 'u8[32768]{0}', space=vmem, size = 0x8000, scoped, tag = 'input window, operand 4, single buffered']
    #allocation11 [shape = 'u8[32768]{0}', space=vmem, size = 0x8000, scoped, tag = 'input window, operand 7, single buffered']
    #allocation12 [shape = 's32[1]{0}', space=sflag, size = 0x4, scoped, tag = 'scoped memory for tpu_custom_call.1']
    #allocation13 [shape = 'u8[1024]{0}', space=vmem, size = 0x400, scoped, tag = 'output window, operand 0, single buffered']
    #allocation14 [shape = 'u8[1024]{0}', space=vmem, size = 0x400, scoped, tag = 'output window, operand 1, single buffered']
    #allocation15 [shape = 's32[1]{0}', space=sflag, size = 0x4, scoped, tag = 'scoped memory for tpu_custom_call.1']
    %19 = vsyncpa [#allocation6], 0
    %20 = vsyncpa [#allocation9], 0
    %21 = vsyncpa [#allocation12], 0
    %22 = vsyncpa [#allocation7], 0
    %23 = vsyncpa [#allocation15], 0
    // Predicated region
    $region2: #{tpu_custom_call.1} parent=1 // pred_check
      _
    $region3: #{tpu_custom_call.1} parent=1 // pred_check_branch
      %25 = sbr.rel (0) target = $region5
    $region4: #{tpu_custom_call.1} parent=1 // pred_region
      %s27 = ssub.s32 256, 256
      %28 = vsyncadd [#allocation6], %s27
      %s30 = sshll.u32 [#allocation5], 4
      %s31 = int_to_ptr.vmem [resolvable:$true] %s30
      %33 = dma.hbm_to_vmem [thread:$0]  %s1, 256, %s31, [#allocation6]
    $region5: #{tpu_custom_call.1} parent=1 // pred_fallthru
      _
    // Predicated region
    $region6: #{tpu_custom_call.1} parent=1 // pred_check
      _
    $region7: #{tpu_custom_call.1} parent=1 // pred_check_branch
      %35 = sbr.rel (0) target = $region9
    $region8: #{tpu_custom_call.1} parent=1 // pred_region
      %s37 = ssub.s32 8192, 8192
      %38 = vsyncadd [#allocation9], %s37
      %s39 = sshll.u32 [#allocation8], 4
      %s40 = int_to_ptr.vmem [resolvable:$true] %s39
      %45 = dma.hbm_to_vmem [thread:$0]  %s2, 8192, %s40, [#allocation9], 64, 64, 4
    $region9: #{tpu_custom_call.1} parent=1 // pred_fallthru
      _
    // Predicated region
    $region10: #{tpu_custom_call.1} parent=1 // pred_check
      _
    $region11: #{tpu_custom_call.1} parent=1 // pred_check_branch
      %47 = sbr.rel (0) target = $region13
    $region12: #{tpu_custom_call.1} parent=1 // pred_region
      _
    $region13: #{tpu_custom_call.1} parent=1 // pred_fallthru
      _
    // Predicated region
    $region14: #{tpu_custom_call.1} parent=1 // pred_check
      _
    $region15: #{tpu_custom_call.1} parent=1 // pred_check_branch
      %49 = sbr.rel (0) target = $region17
    $region16: #{tpu_custom_call.1} parent=1 // pred_region
      %s51 = ssub.s32 1024, 1024
      %52 = vsyncadd [#allocation9], %s51
      %s53 = sshll.u32 [#allocation10], 4
      %s54 = int_to_ptr.vmem [resolvable:$true] %s53
      %59 = dma.hbm_to_vmem [thread:$0]  %s4, 1024, %s54, [#allocation9], 64, 64, 4
    $region17: #{tpu_custom_call.1} parent=1 // pred_fallthru
      _
    // Predicated region
    $region18: #{tpu_custom_call.1} parent=1 // pred_check
      _
    $region19: #{tpu_custom_call.1} parent=1 // pred_check_branch
      %61 = sbr.rel (0) target = $region21
    $region20: #{tpu_custom_call.1} parent=1 // pred_region
      _
    $region21: #{tpu_custom_call.1} parent=1 // pred_fallthru
      _
    // Predicated region
    $region22: #{tpu_custom_call.1} parent=1 // pred_check
      _
    $region23: #{tpu_custom_call.1} parent=1 // pred_check_branch
      %63 = sbr.rel (0) target = $region25
    $region24: #{tpu_custom_call.1} parent=1 // pred_region
      %s64 = sld [smem:[#allocation3]]
      %p65 = scmp.lt.s32.totalorder %s64, 1
      %s66 = scalar_select %p65, %s64, 1
      %s67 = smul.addr %s66, 2
      %s68 = scalar_lea.vmem %s6, %s67
      %s69 = sld [smem:[#allocation3]]
    $region25: #{tpu_custom_call.1} parent=1 // pred_fallthru
      _
    // Predicated region
    $region26: #{tpu_custom_call.1} parent=1 // pred_check
      _
    $region27: #{tpu_custom_call.1} parent=1 // pred_check_branch
      %71 = sbr.rel (0) target = $region29
    $region28: #{tpu_custom_call.1} parent=1 // pred_region
      %s73 = ssub.s32 1024, 1024
      %74 = vsyncadd [#allocation12], %s73
      %s75 = sshll.u32 [#allocation11], 4
      %s76 = int_to_ptr.vmem [resolvable:$true] %s75
      %81 = dma.hbm_to_vmem [thread:$0]  %s7, 1024, %s76, [#allocation12], 64, 64, 4
    $region29: #{tpu_custom_call.1} parent=1 // pred_fallthru
      _
    // Predicated region
    $region30: #{tpu_custom_call.1} parent=1 // pred_check
      _
    $region31: #{tpu_custom_call.1} parent=1 // pred_check_branch
      %83 = sbr.rel (0) target = $region33
    $region32: #{tpu_custom_call.1} parent=1 // pred_region
      _
    $region33: #{tpu_custom_call.1} parent=1 // pred_fallthru
      _
    // Predicated region
    $region34: #{tpu_custom_call.1} parent=1 // pred_check
      _
    $region35: #{tpu_custom_call.1} parent=1 // pred_check_branch
      %85 = sbr.rel (0) target = $region37
    $region36: #{tpu_custom_call.1} parent=1 // pred_region
      _
    $region37: #{tpu_custom_call.1} parent=1 // pred_fallthru
      _
    // Predicated region
    $region38: #{tpu_custom_call.1} parent=1 // pred_check
      _
    $region39: #{tpu_custom_call.1} parent=1 // pred_check_branch
      %87 = sbr.rel (0) target = $region41
    $region40: #{tpu_custom_call.1} parent=1 // pred_region
      %88 = dma.done [#allocation6], 256
    $region41: #{tpu_custom_call.1} parent=1 // pred_fallthru
      _
    // Predicated region
    $region42: #{tpu_custom_call.1} parent=1 // pred_check
      _
    $region43: #{tpu_custom_call.1} parent=1 // pred_check_branch
      %90 = sbr.rel (0) target = $region45
    $region44: #{tpu_custom_call.1} parent=1 // pred_region
      %91 = dma.done [#allocation9], 8192
    $region45: #{tpu_custom_call.1} parent=1 // pred_fallthru
      _
    // Predicated region
    $region46: #{tpu_custom_call.1} parent=1 // pred_check
      _
    $region47: #{tpu_custom_call.1} parent=1 // pred_check_branch
      %93 = sbr.rel (0) target = $region49
    $region48: #{tpu_custom_call.1} parent=1 // pred_region
      %94 = dma.done [#allocation9], 1024
    $region49: #{tpu_custom_call.1} parent=1 // pred_fallthru
      _
    // Predicated region
    $region50: #{tpu_custom_call.1} parent=1 // pred_check
      _
    $region51: #{tpu_custom_call.1} parent=1 // pred_check_branch
      %96 = sbr.rel (0) target = $region53
    $region52: #{tpu_custom_call.1} parent=1 // pred_region
      %97 = dma.done [#allocation12], 1024
    $region53: #{tpu_custom_call.1} parent=1 // pred_fallthru
      _
    %s98 = sld [smem:[#allocation3]]
    %p99 = scmp.lt.s32.totalorder %s98, 1
    %s100 = scalar_select %p99, %s98, 1
    %s101 = smul.addr %s100, 2
    %s102 = scalar_lea.vmem %s6, %s101
    %s103 = sld [smem:[#allocation3]]
    %p104 = scmp.lt.s32.totalorder %s103, 1
    %s105 = scalar_select %p104, %s103, 1
    %s106 = smul.addr %s105, 2
    %s107 = scalar_lea.vmem %s6, %s106
    %s108 = sld [smem:[#allocation3]]
    %s110 = sld [smem:[#allocation4]]
    %v111 = vld [vmem:[%s107] sm:$0x3]
    %v112 = vstv %s110
    %v113 = vmul.f32 %v112, %v111
    %v114 = vxor.u32 %v113, 2147483648
    %v115 = vmul.f32 %v114, 1.442695
    %v116 = vpow.pop %v115
    %v117 = vadd.f32 %v116, 1.0
    %v118 = vrcp.pop %v117
    %v119 = vmul.f32 1.0, %v118
    %120 = vst [vmem:[#allocation14] sm:$0x3] %v119
    %v121 = vld [vmem:[#allocation5] sm:$0xff]
    %v122 = vld [vmem:[#allocation5 + $0x8] sm:$0xff]
    %v125 = vcombine.high %v121, %v121
    %v127 = vunpack.c.l.s4 1983009808
    %v128 = vunpack.c.0.s8 %v127
    %v129 = vlaneseq
    %v130 = vshrl.u32 %v129, 7
    %v131 = vsub.s32 %v128, %v130
    %v132 = vrot.slane %v121, %v131
    %v134 = vunpack.c.l.s4 1983009808
    %v135 = vunpack.c.0.s8 %v134
    %v136 = vlaneseq
    %v137 = vshrl.u32 %v136, 7
    %v138 = vsub.s32 %v135, %v137
    %v139 = vrot.slane %v125, %v138
    %v140 = vcombine.high %v132, %v132
    %v141 = vcombine.high %v139, %v139
    %v142 = vcombine.high %v122, %v122
    %v144 = vunpack.c.l.s4 1983009808
    %v145 = vunpack.c.0.s8 %v144
    %v146 = vlaneseq
    %v147 = vshrl.u32 %v146, 7
    %v148 = vsub.s32 %v145, %v147
    %v149 = vrot.slane %v122, %v148
    %v151 = vunpack.c.l.s4 1983009808
    %v152 = vunpack.c.0.s8 %v151
    %v153 = vlaneseq
    %v154 = vshrl.u32 %v153, 7
    %v155 = vsub.s32 %v152, %v154
    %v156 = vrot.slane %v142, %v155
    %v157 = vcombine.high %v149, %v149
    %v158 = vcombine.high %v156, %v156
    %v167 = vpack.c.bf16 %v132, %v132
    %v168 = vpack.c.bf16 %v140, %v140
    %v169 = vpack.c.bf16 %v139, %v139
    %v170 = vpack.c.bf16 %v141, %v141
    %v171 = vpack.c.bf16 %v149, %v149
    %v172 = vpack.c.bf16 %v157, %v157
    %v173 = vpack.c.bf16 %v156, %v156
    %v174 = vpack.c.bf16 %v158, %v158
    %v175 = vld [vmem:[#allocation8] sm:$0xf]
    %v176 = vld [vmem:[#allocation8 + $0x4] sm:$0xf]
    %v177 = vld [vmem:[#allocation8 + $0x8] sm:$0xf]
    %v178 = vld [vmem:[#allocation8 + $0xc] sm:$0xf]
    %v179 = vld [vmem:[#allocation8 + $0x10] sm:$0xf]
    %v180 = vld [vmem:[#allocation8 + $0x14] sm:$0xf]
    %v181 = vld [vmem:[#allocation8 + $0x18] sm:$0xf]
    %v182 = vld [vmem:[#allocation8 + $0x1c] sm:$0xf]
    %v183 = vld [vmem:[#allocation8 + $0x20] sm:$0xf]
    %v184 = vld [vmem:[#allocation8 + $0x24] sm:$0xf]
    %v185 = vld [vmem:[#allocation8 + $0x28] sm:$0xf]
    %v186 = vld [vmem:[#allocation8 + $0x2c] sm:$0xf]
    %v187 = vld [vmem:[#allocation8 + $0x30] sm:$0xf]
    %v188 = vld [vmem:[#allocation8 + $0x34] sm:$0xf]
    %v189 = vld [vmem:[#allocation8 + $0x38] sm:$0xf]
    %v190 = vld [vmem:[#allocation8 + $0x3c] sm:$0xf]
    %v191 = vld [vmem:[#allocation8 + $0x40] sm:$0xf]
    %v192 = vld [vmem:[#allocation8 + $0x44] sm:$0xf]
    %v193 = vld [vmem:[#allocation8 + $0x48] sm:$0xf]
    %v194 = vld [vmem:[#allocation8 + $0x4c] sm:$0xf]
    %v195 = vld [vmem:[#allocation8 + $0x50] sm:$0xf]
    %v196 = vld [vmem:[#allocation8 + $0x54] sm:$0xf]
    %v197 = vld [vmem:[#allocation8 + $0x58] sm:$0xf]
    %v198 = vld [vmem:[#allocation8 + $0x5c] sm:$0xf]
    %v199 = vld [vmem:[#allocation8 + $0x60] sm:$0xf]
    %v200 = vld [vmem:[#allocation8 + $0x64] sm:$0xf]
    %v201 = vld [vmem:[#allocation8 + $0x68] sm:$0xf]
    %v202 = vld [vmem:[#allocation8 + $0x6c] sm:$0xf]
    %v203 = vld [vmem:[#allocation8 + $0x70] sm:$0xf]
    %v204 = vld [vmem:[#allocation8 + $0x74] sm:$0xf]
    %v205 = vld [vmem:[#allocation8 + $0x78] sm:$0xf]
    %v206 = vld [vmem:[#allocation8 + $0x7c] sm:$0xf]
    %v207 = vld [vmem:[#allocation8 + $0x80] sm:$0xf]
    %v208 = vld [vmem:[#allocation8 + $0x84] sm:$0xf]
    %v209 = vld [vmem:[#allocation8 + $0x88] sm:$0xf]
    %v210 = vld [vmem:[#allocation8 + $0x8c] sm:$0xf]
    %v211 = vld [vmem:[#allocation8 + $0x90] sm:$0xf]
    %v212 = vld [vmem:[#allocation8 + $0x94] sm:$0xf]
    %v213 = vld [vmem:[#allocation8 + $0x98] sm:$0xf]
    %v214 = vld [vmem:[#allocation8 + $0x9c] sm:$0xf]
    %v215 = vld [vmem:[#allocation8 + $0xa0] sm:$0xf]
    %v216 = vld [vmem:[#allocation8 + $0xa4] sm:$0xf]
    %v217 = vld [vmem:[#allocation8 + $0xa8] sm:$0xf]
    %v218 = vld [vmem:[#allocation8 + $0xac] sm:$0xf]
    %v219 = vld [vmem:[#allocation8 + $0xb0] sm:$0xf]
    %v220 = vld [vmem:[#allocation8 + $0xb4] sm:$0xf]
    %v221 = vld [vmem:[#allocation8 + $0xb8] sm:$0xf]
    %v222 = vld [vmem:[#allocation8 + $0xbc] sm:$0xf]
    %v223 = vld [vmem:[#allocation8 + $0xc0] sm:$0xf]
    %v224 = vld [vmem:[#allocation8 + $0xc4] sm:$0xf]
    %v225 = vld [vmem:[#allocation8 + $0xc8] sm:$0xf]
    %v226 = vld [vmem:[#allocation8 + $0xcc] sm:$0xf]
    %v227 = vld [vmem:[#allocation8 + $0xd0] sm:$0xf]
    %v228 = vld [vmem:[#allocation8 + $0xd4] sm:$0xf]
    %v229 = vld [vmem:[#allocation8 + $0xd8] sm:$0xf]
    %v230 = vld [vmem:[#allocation8 + $0xdc] sm:$0xf]
    %v231 = vld [vmem:[#allocation8 + $0xe0] sm:$0xf]
    %v232 = vld [vmem:[#allocation8 + $0xe4] sm:$0xf]
    %v233 = vld [vmem:[#allocation8 + $0xe8] sm:$0xf]
    %v234 = vld [vmem:[#allocation8 + $0xec] sm:$0xf]
    %v235 = vld [vmem:[#allocation8 + $0xf0] sm:$0xf]
    %v236 = vld [vmem:[#allocation8 + $0xf4] sm:$0xf]
    %v237 = vld [vmem:[#allocation8 + $0xf8] sm:$0xf]
    %v238 = vld [vmem:[#allocation8 + $0xfc] sm:$0xf]
    %v239 = vld [vmem:[#allocation8 + $0x100] sm:$0xf]
    %v240 = vld [vmem:[#allocation8 + $0x104] sm:$0xf]
    %v241 = vld [vmem:[#allocation8 + $0x108] sm:$0xf]
    %v242 = vld [vmem:[#allocation8 + $0x10c] sm:$0xf]
    %v243 = vld [vmem:[#allocation8 + $0x110] sm:$0xf]
    %v244 = vld [vmem:[#allocation8 + $0x114] sm:$0xf]
    %v245 = vld [vmem:[#allocation8 + $0x118] sm:$0xf]
    %v246 = vld [vmem:[#allocation8 + $0x11c] sm:$0xf]
    %v247 = vld [vmem:[#allocation8 + $0x120] sm:$0xf]
    %v248 = vld [vmem:[#allocation8 + $0x124] sm:$0xf]
    %v249 = vld [vmem:[#allocation8 + $0x128] sm:$0xf]
    %v250 = vld [vmem:[#allocation8 + $0x12c] sm:$0xf]
    %v251 = vld [vmem:[#allocation8 + $0x130] sm:$0xf]
    %v252 = vld [vmem:[#allocation8 + $0x134] sm:$0xf]
    %v253 = vld [vmem:[#allocation8 + $0x138] sm:$0xf]
    %v254 = vld [vmem:[#allocation8 + $0x13c] sm:$0xf]
    %v255 = vld [vmem:[#allocation8 + $0x140] sm:$0xf]
    %v256 = vld [vmem:[#allocation8 + $0x144] sm:$0xf]
    %v257 = vld [vmem:[#allocation8 + $0x148] sm:$0xf]
    %v258 = vld [vmem:[#allocation8 + $0x14c] sm:$0xf]
    %v259 = vld [vmem:[#allocation8 + $0x150] sm:$0xf]
    %v260 = vld [vmem:[#allocation8 + $0x154] sm:$0xf]
    %v261 = vld [vmem:[#allocation8 + $0x158] sm:$0xf]
    %v262 = vld [vmem:[#allocation8 + $0x15c] sm:$0xf]
    %v263 = vld [vmem:[#allocation8 + $0x160] sm:$0xf]
    %v264 = vld [vmem:[#allocation8 + $0x164] sm:$0xf]
    %v265 = vld [vmem:[#allocation8 + $0x168] sm:$0xf]
    %v266 = vld [vmem:[#allocation8 + $0x16c] sm:$0xf]
    %v267 = vld [vmem:[#allocation8 + $0x170] sm:$0xf]
    %v268 = vld [vmem:[#allocation8 + $0x174] sm:$0xf]
    %v269 = vld [vmem:[#allocation8 + $0x178] sm:$0xf]
    %v270 = vld [vmem:[#allocation8 + $0x17c] sm:$0xf]
    %v271 = vld [vmem:[#allocation8 + $0x180] sm:$0xf]
    %v272 = vld [vmem:[#allocation8 + $0x184] sm:$0xf]
    %v273 = vld [vmem:[#allocation8 + $0x188] sm:$0xf]
    %v274 = vld [vmem:[#allocation8 + $0x18c] sm:$0xf]
    %v275 = vld [vmem:[#allocation8 + $0x190] sm:$0xf]
    %v276 = vld [vmem:[#allocation8 + $0x194] sm:$0xf]
    %v277 = vld [vmem:[#allocation8 + $0x198] sm:$0xf]
    %v278 = vld [vmem:[#allocation8 + $0x19c] sm:$0xf]
    %v279 = vld [vmem:[#allocation8 + $0x1a0] sm:$0xf]
    %v280 = vld [vmem:[#allocation8 + $0x1a4] sm:$0xf]
    %v281 = vld [vmem:[#allocation8 + $0x1a8] sm:$0xf]
    %v282 = vld [vmem:[#allocation8 + $0x1ac] sm:$0xf]
    %v283 = vld [vmem:[#allocation8 + $0x1b0] sm:$0xf]
    %v284 = vld [vmem:[#allocation8 + $0x1b4] sm:$0xf]
    %v285 = vld [vmem:[#allocation8 + $0x1b8] sm:$0xf]
    %v286 = vld [vmem:[#allocation8 + $0x1bc] sm:$0xf]
    %v287 = vld [vmem:[#allocation8 + $0x1c0] sm:$0xf]
    %v288 = vld [vmem:[#allocation8 + $0x1c4] sm:$0xf]
    %v289 = vld [vmem:[#allocation8 + $0x1c8] sm:$0xf]
    %v290 = vld [vmem:[#allocation8 + $0x1cc] sm:$0xf]
    %v291 = vld [vmem:[#allocation8 + $0x1d0] sm:$0xf]
    %v292 = vld [vmem:[#allocation8 + $0x1d4] sm:$0xf]
    %v293 = vld [vmem:[#allocation8 + $0x1d8] sm:$0xf]
    %v294 = vld [vmem:[#allocation8 + $0x1dc] sm:$0xf]
    %v295 = vld [vmem:[#allocation8 + $0x1e0] sm:$0xf]
    %v296 = vld [vmem:[#allocation8 + $0x1e4] sm:$0xf]
    %v297 = vld [vmem:[#allocation8 + $0x1e8] sm:$0xf]
    %v298 = vld [vmem:[#allocation8 + $0x1ec] sm:$0xf]
    %v299 = vld [vmem:[#allocation8 + $0x1f0] sm:$0xf]
    %v300 = vld [vmem:[#allocation8 + $0x1f4] sm:$0xf]
    %v301 = vld [vmem:[#allocation8 + $0x1f8] sm:$0xf]
    %v302 = vld [vmem:[#allocation8 + $0x1fc] sm:$0xf]
    %v303 = vld [vmem:[%s3] sm:$0x1]
    %v305 = vlaneseq
    %v306 = vshrl.u32 %v305, 7
    %v307 = vsub.s32 0, %v306
    %v308 = vrot.slane %v303, %v307
    %v438 = vunpack.c.l.b16 %v175
    %v439 = vunpack.c.l.b16 %v176
    %v440 = vunpack.c.l.b16 %v177
    %v441 = vunpack.c.l.b16 %v178
    %v442 = vunpack.c.l.b16 %v179
    %v443 = vunpack.c.l.b16 %v180
    %v444 = vunpack.c.l.b16 %v181
    %v445 = vunpack.c.l.b16 %v182
    %v446 = vunpack.c.l.b16 %v183
    %v447 = vunpack.c.l.b16 %v184
    %v448 = vunpack.c.l.b16 %v185
    %v449 = vunpack.c.l.b16 %v186
    %v450 = vunpack.c.l.b16 %v187
    %v451 = vunpack.c.l.b16 %v188
    %v452 = vunpack.c.l.b16 %v189
    %v453 = vunpack.c.l.b16 %v190
    %v454 = vunpack.c.l.b16 %v191
    %v455 = vunpack.c.l.b16 %v192
    %v456 = vunpack.c.l.b16 %v193
    %v457 = vunpack.c.l.b16 %v194
    %v458 = vunpack.c.l.b16 %v195
    %v459 = vunpack.c.l.b16 %v196
    %v460 = vunpack.c.l.b16 %v197
    %v461 = vunpack.c.l.b16 %v198
    %v462 = vunpack.c.l.b16 %v199
    %v463 = vunpack.c.l.b16 %v200
    %v464 = vunpack.c.l.b16 %v201
    %v465 = vunpack.c.l.b16 %v202
    %v466 = vunpack.c.l.b16 %v203
    %v467 = vunpack.c.l.b16 %v204
    %v468 = vunpack.c.l.b16 %v205
    %v469 = vunpack.c.l.b16 %v206
    %v470 = vunpack.c.l.b16 %v207
    %v471 = vunpack.c.l.b16 %v208
    %v472 = vunpack.c.l.b16 %v209
    %v473 = vunpack.c.l.b16 %v210
    %v474 = vunpack.c.l.b16 %v211
    %v475 = vunpack.c.l.b16 %v212
    %v476 = vunpack.c.l.b16 %v213
    %v477 = vunpack.c.l.b16 %v214
    %v478 = vunpack.c.l.b16 %v215
    %v479 = vunpack.c.l.b16 %v216
    %v480 = vunpack.c.l.b16 %v217
    %v481 = vunpack.c.l.b16 %v218
    %v482 = vunpack.c.l.b16 %v219
    %v483 = vunpack.c.l.b16 %v220
    %v484 = vunpack.c.l.b16 %v221
    %v485 = vunpack.c.l.b16 %v222
    %v486 = vunpack.c.l.b16 %v223
    %v487 = vunpack.c.l.b16 %v224
    %v488 = vunpack.c.l.b16 %v225
    %v489 = vunpack.c.l.b16 %v226
    %v490 = vunpack.c.l.b16 %v227
    %v491 = vunpack.c.l.b16 %v228
    %v492 = vunpack.c.l.b16 %v229
    %v493 = vunpack.c.l.b16 %v230
    %v494 = vunpack.c.l.b16 %v231
    %v495 = vunpack.c.l.b16 %v232
    %v496 = vunpack.c.l.b16 %v233
    %v497 = vunpack.c.l.b16 %v234
    %v498 = vunpack.c.l.b16 %v235
    %v499 = vunpack.c.l.b16 %v236
    %v500 = vunpack.c.l.b16 %v237
    %v501 = vunpack.c.l.b16 %v238
    %v502 = vunpack.c.l.b16 %v239
    %v503 = vunpack.c.l.b16 %v240
    %v504 = vunpack.c.l.b16 %v241
    %v505 = vunpack.c.l.b16 %v242
    %v506 = vunpack.c.l.b16 %v243
    %v507 = vunpack.c.l.b16 %v244
    %v508 = vunpack.c.l.b16 %v245
    %v509 = vunpack.c.l.b16 %v246
    %v510 = vunpack.c.l.b16 %v247
    %v511 = vunpack.c.l.b16 %v248
    %v512 = vunpack.c.l.b16 %v249
    %v513 = vunpack.c.l.b16 %v250
    %v514 = vunpack.c.l.b16 %v251
    %v515 = vunpack.c.l.b16 %v252
    %v516 = vunpack.c.l.b16 %v253
    %v517 = vunpack.c.l.b16 %v254
    %v518 = vunpack.c.l.b16 %v255
    %v519 = vunpack.c.l.b16 %v256
    %v520 = vunpack.c.l.b16 %v257
    %v521 = vunpack.c.l.b16 %v258
    %v522 = vunpack.c.l.b16 %v259
    %v523 = vunpack.c.l.b16 %v260
    %v524 = vunpack.c.l.b16 %v261
    %v525 = vunpack.c.l.b16 %v262
    %v526 = vunpack.c.l.b16 %v263
    %v527 = vunpack.c.l.b16 %v264
    %v528 = vunpack.c.l.b16 %v265
    %v529 = vunpack.c.l.b16 %v266
    %v530 = vunpack.c.l.b16 %v267
    %v531 = vunpack.c.l.b16 %v268
    %v532 = vunpack.c.l.b16 %v269
    %v533 = vunpack.c.l.b16 %v270
    %v534 = vunpack.c.l.b16 %v271
    %v535 = vunpack.c.l.b16 %v272
    %v536 = vunpack.c.l.b16 %v273
    %v537 = vunpack.c.l.b16 %v274
    %v538 = vunpack.c.l.b16 %v275
    %v539 = vunpack.c.l.b16 %v276
    %v540 = vunpack.c.l.b16 %v277
    %v541 = vunpack.c.l.b16 %v278
    %v542 = vunpack.c.l.b16 %v279
    %v543 = vunpack.c.l.b16 %v280
    %v544 = vunpack.c.l.b16 %v281
    %v545 = vunpack.c.l.b16 %v282
    %v546 = vunpack.c.l.b16 %v283
    %v547 = vunpack.c.l.b16 %v284
    %v548 = vunpack.c.l.b16 %v285
    %v549 = vunpack.c.l.b16 %v286
    %v550 = vunpack.c.l.b16 %v287
    %v551 = vunpack.c.l.b16 %v288
    %v552 = vunpack.c.l.b16 %v289
    %v553 = vunpack.c.l.b16 %v290
    %v554 = vunpack.c.l.b16 %v291
    %v555 = vunpack.c.l.b16 %v292
    %v556 = vunpack.c.l.b16 %v293
    %v557 = vunpack.c.l.b16 %v294
    %v558 = vunpack.c.l.b16 %v295
    %v559 = vunpack.c.l.b16 %v296
    %v560 = vunpack.c.l.b16 %v297
    %v561 = vunpack.c.l.b16 %v298
    %v562 = vunpack.c.l.b16 %v299
    %v563 = vunpack.c.l.b16 %v300
    %v564 = vunpack.c.l.b16 %v301
    %v565 = vunpack.c.l.b16 %v302
    %v566 = vpack.c.b16 %v439, %v438
    %v567 = vpack.c.b16 %v441, %v440
    %v568 = vpack.c.b16 %v443, %v442
    %v569 = vpack.c.b16 %v445, %v444
    %v570 = vpack.c.b16 %v447, %v446
    %v571 = vpack.c.b16 %v449, %v448
    %v572 = vpack.c.b16 %v451, %v450
    %v573 = vpack.c.b16 %v453, %v452
    %v574 = vpack.c.b16 %v455, %v454
    %v575 = vpack.c.b16 %v457, %v456
    %v576 = vpack.c.b16 %v459, %v458
    %v577 = vpack.c.b16 %v461, %v460
    %v578 = vpack.c.b16 %v463, %v462
    %v579 = vpack.c.b16 %v465, %v464
    %v580 = vpack.c.b16 %v467, %v466
    %v581 = vpack.c.b16 %v469, %v468
    %v582 = vpack.c.b16 %v471, %v470
    %v583 = vpack.c.b16 %v473, %v472
    %v584 = vpack.c.b16 %v475, %v474
    %v585 = vpack.c.b16 %v477, %v476
    %v586 = vpack.c.b16 %v479, %v478
    %v587 = vpack.c.b16 %v481, %v480
    %v588 = vpack.c.b16 %v483, %v482
    %v589 = vpack.c.b16 %v485, %v484
    %v590 = vpack.c.b16 %v487, %v486
    %v591 = vpack.c.b16 %v489, %v488
    %v592 = vpack.c.b16 %v491, %v490
    %v593 = vpack.c.b16 %v493, %v492
    %v594 = vpack.c.b16 %v495, %v494
    %v595 = vpack.c.b16 %v497, %v496
    %v596 = vpack.c.b16 %v499, %v498
    %v597 = vpack.c.b16 %v501, %v500
    %v598 = vpack.c.b16 %v503, %v502
    %v599 = vpack.c.b16 %v505, %v504
    %v600 = vpack.c.b16 %v507, %v506
    %v601 = vpack.c.b16 %v509, %v508
    %v602 = vpack.c.b16 %v511, %v510
    %v603 = vpack.c.b16 %v513, %v512
    %v604 = vpack.c.b16 %v515, %v514
    %v605 = vpack.c.b16 %v517, %v516
    %v606 = vpack.c.b16 %v519, %v518
    %v607 = vpack.c.b16 %v521, %v520
    %v608 = vpack.c.b16 %v523, %v522
    %v609 = vpack.c.b16 %v525, %v524
    %v610 = vpack.c.b16 %v527, %v526
    %v611 = vpack.c.b16 %v529, %v528
    %v612 = vpack.c.b16 %v531, %v530
    %v613 = vpack.c.b16 %v533, %v532
    %v614 = vpack.c.b16 %v535, %v534
    %v615 = vpack.c.b16 %v537, %v536
    %v616 = vpack.c.b16 %v539, %v538
    %v617 = vpack.c.b16 %v541, %v540
    %v618 = vpack.c.b16 %v543, %v542
    %v619 = vpack.c.b16 %v545, %v544
    %v620 = vpack.c.b16 %v547, %v546
    %v621 = vpack.c.b16 %v549, %v548
    %v622 = vpack.c.b16 %v551, %v550
    %v623 = vpack.c.b16 %v553, %v552
    %v624 = vpack.c.b16 %v555, %v554
    %v625 = vpack.c.b16 %v557, %v556
    %v626 = vpack.c.b16 %v559, %v558
    %v627 = vpack.c.b16 %v561, %v560
    %v628 = vpack.c.b16 %v563, %v562
    %v629 = vpack.c.b16 %v565, %v564
    %694 = vmatprep.subr.bf16.mxu0 0
    %695 = vmatpush1.bf16.msra.mxu0 %v566
    %696 = vmatprep.subr.bf16.mxu0 0
    %697 = vmatpush1.bf16.msra.mxu0 %v567
    %698 = vmatprep.subr.bf16.mxu0 0
    %699 = vmatpush1.bf16.msra.mxu0 %v568
    %700 = vmatprep.subr.bf16.mxu0 0
    %701 = vmatpush1.bf16.msra.mxu0 %v569
    %702 = vmatprep.subr.bf16.mxu0 0
    %703 = vmatpush1.bf16.msra.mxu0 %v570
    %704 = vmatprep.subr.bf16.mxu0 0
    %705 = vmatpush1.bf16.msra.mxu0 %v571
    %706 = vmatprep.subr.bf16.mxu0 0
    %707 = vmatpush1.bf16.msra.mxu0 %v572
    %708 = vmatprep.subr.bf16.mxu0 0
    %709 = vmatpush1.bf16.msra.mxu0 %v573
    %710 = vmatprep.subr.bf16.mxu0 0
    %711 = vmatpush1.bf16.msra.mxu0 %v574
    %712 = vmatprep.subr.bf16.mxu0 0
    %713 = vmatpush1.bf16.msra.mxu0 %v575
    %714 = vmatprep.subr.bf16.mxu0 0
    %715 = vmatpush1.bf16.msra.mxu0 %v576
    %716 = vmatprep.subr.bf16.mxu0 0
    %717 = vmatpush1.bf16.msra.mxu0 %v577
    %718 = vmatprep.subr.bf16.mxu0 0
    %719 = vmatpush1.bf16.msra.mxu0 %v578
    %720 = vmatprep.subr.bf16.mxu0 0
    %721 = vmatpush1.bf16.msra.mxu0 %v579
    %722 = vmatprep.subr.bf16.mxu0 0
    %723 = vmatpush1.bf16.msra.mxu0 %v580
    %724 = vmatprep.subr.bf16.mxu0 0
    %725 = vmatpush1.bf16.msra.mxu0 %v581
    %726 = vmatprep.mubr.bf16.mxu0 %v168
    %727 = vmatmul.mubr.bf16.gmra.mrb[0].mxu0 %v167
    %v728 = vpop.f32.mrb[0].mxu0
    %v729 = vadd.f32 %v308, %v728
    %v730 = vpop.f32.mrb[0].mxu0
    %v731 = vpop.f32.mrb[0].mxu0
    %v732 = vpop.f32.mrb[0].mxu0
    %733 = vdwg.mxu0
    %734 = vmatprep.subr.bf16.mxu0 0
    %735 = vmatpush1.bf16.msra.mxu0 %v582
    %736 = vmatprep.subr.bf16.mxu0 0
    %737 = vmatpush1.bf16.msra.mxu0 %v583
    %738 = vmatprep.subr.bf16.mxu0 0
    %739 = vmatpush1.bf16.msra.mxu0 %v584
    %740 = vmatprep.subr.bf16.mxu0 0
    %741 = vmatpush1.bf16.msra.mxu0 %v585
    %742 = vmatprep.subr.bf16.mxu0 0
    %743 = vmatpush1.bf16.msra.mxu0 %v586
    %744 = vmatprep.subr.bf16.mxu0 0
    %745 = vmatpush1.bf16.msra.mxu0 %v587
    %746 = vmatprep.subr.bf16.mxu0 0
    %747 = vmatpush1.bf16.msra.mxu0 %v588
    %748 = vmatprep.subr.bf16.mxu0 0
    %749 = vmatpush1.bf16.msra.mxu0 %v589
    %750 = vmatprep.subr.bf16.mxu0 0
    %751 = vmatpush1.bf16.msra.mxu0 %v590
    %752 = vmatprep.subr.bf16.mxu0 0
    %753 = vmatpush1.bf16.msra.mxu0 %v591
    %754 = vmatprep.subr.bf16.mxu0 0
    %755 = vmatpush1.bf16.msra.mxu0 %v592
    %756 = vmatprep.subr.bf16.mxu0 0
    %757 = vmatpush1.bf16.msra.mxu0 %v593
    %758 = vmatprep.subr.bf16.mxu0 0
    %759 = vmatpush1.bf16.msra.mxu0 %v594
    %760 = vmatprep.subr.bf16.mxu0 0
    %761 = vmatpush1.bf16.msra.mxu0 %v595
    %762 = vmatprep.subr.bf16.mxu0 0
    %763 = vmatpush1.bf16.msra.mxu0 %v596
    %764 = vmatprep.subr.bf16.mxu0 0
    %765 = vmatpush1.bf16.msra.mxu0 %v597
    %766 = vmatprep.mubr.bf16.mxu0 %v170
    %767 = vmatmul.mubr.bf16.gmra.mrb[0].mxu0 %v169
    %v768 = vpop.f32.mrb[0].mxu0
    %v769 = vadd.f32 %v729, %v768
    %v770 = vpop.f32.mrb[0].mxu0
    %v771 = vpop.f32.mrb[0].mxu0
    %v772 = vpop.f32.mrb[0].mxu0
    %773 = vdwg.mxu0
    %774 = vmatprep.subr.bf16.mxu0 0
    %775 = vmatpush1.bf16.msra.mxu0 %v598
    %776 = vmatprep.subr.bf16.mxu0 0
    %777 = vmatpush1.bf16.msra.mxu0 %v599
    %778 = vmatprep.subr.bf16.mxu0 0
    %779 = vmatpush1.bf16.msra.mxu0 %v600
    %780 = vmatprep.subr.bf16.mxu0 0
    %781 = vmatpush1.bf16.msra.mxu0 %v601
    %782 = vmatprep.subr.bf16.mxu0 0
    %783 = vmatpush1.bf16.msra.mxu0 %v602
    %784 = vmatprep.subr.bf16.mxu0 0
    %785 = vmatpush1.bf16.msra.mxu0 %v603
    %786 = vmatprep.subr.bf16.mxu0 0
    %787 = vmatpush1.bf16.msra.mxu0 %v604
    %788 = vmatprep.subr.bf16.mxu0 0
    %789 = vmatpush1.bf16.msra.mxu0 %v605
    %790 = vmatprep.subr.bf16.mxu0 0
    %791 = vmatpush1.bf16.msra.mxu0 %v606
    %792 = vmatprep.subr.bf16.mxu0 0
    %793 = vmatpush1.bf16.msra.mxu0 %v607
    %794 = vmatprep.subr.bf16.mxu0 0
    %795 = vmatpush1.bf16.msra.mxu0 %v608
    %796 = vmatprep.subr.bf16.mxu0 0
    %797 = vmatpush1.bf16.msra.mxu0 %v609
    %798 = vmatprep.subr.bf16.mxu0 0
    %799 = vmatpush1.bf16.msra.mxu0 %v610
    %800 = vmatprep.subr.bf16.mxu0 0
    %801 = vmatpush1.bf16.msra.mxu0 %v611
    %802 = vmatprep.subr.bf16.mxu0 0
    %803 = vmatpush1.bf16.msra.mxu0 %v612
    %804 = vmatprep.subr.bf16.mxu0 0
    %805 = vmatpush1.bf16.msra.mxu0 %v613
    %806 = vmatprep.mubr.bf16.mxu0 %v172
    %807 = vmatmul.mubr.bf16.gmra.mrb[0].mxu0 %v171
    %v808 = vpop.f32.mrb[0].mxu0
    %v809 = vadd.f32 %v769, %v808
    %v810 = vpop.f32.mrb[0].mxu0
    %v811 = vpop.f32.mrb[0].mxu0
    %v812 = vpop.f32.mrb[0].mxu0
    %813 = vdwg.mxu0
    %814 = vmatprep.subr.bf16.mxu0 0
    %815 = vmatpush1.bf16.msra.mxu0 %v614
    %816 = vmatprep.subr.bf16.mxu0 0
    %817 = vmatpush1.bf16.msra.mxu0 %v615
    %818 = vmatprep.subr.bf16.mxu0 0
    %819 = vmatpush1.bf16.msra.mxu0 %v616
    %820 = vmatprep.subr.bf16.mxu0 0
    %821 = vmatpush1.bf16.msra.mxu0 %v617
    %822 = vmatprep.subr.bf16.mxu0 0
    %823 = vmatpush1.bf16.msra.mxu0 %v618
    %824 = vmatprep.subr.bf16.mxu0 0
    %825 = vmatpush1.bf16.msra.mxu0 %v619
    %826 = vmatprep.subr.bf16.mxu0 0
    %827 = vmatpush1.bf16.msra.mxu0 %v620
    %828 = vmatprep.subr.bf16.mxu0 0
    %829 = vmatpush1.bf16.msra.mxu0 %v621
    %830 = vmatprep.subr.bf16.mxu0 0
    %831 = vmatpush1.bf16.msra.mxu0 %v622
    %832 = vmatprep.subr.bf16.mxu0 0
    %833 = vmatpush1.bf16.msra.mxu0 %v623
    %834 = vmatprep.subr.bf16.mxu0 0
    %835 = vmatpush1.bf16.msra.mxu0 %v624
    %836 = vmatprep.subr.bf16.mxu0 0
    %837 = vmatpush1.bf16.msra.mxu0 %v625
    %838 = vmatprep.subr.bf16.mxu0 0
    %839 = vmatpush1.bf16.msra.mxu0 %v626
    %840 = vmatprep.subr.bf16.mxu0 0
    %841 = vmatpush1.bf16.msra.mxu0 %v627
    %842 = vmatprep.subr.bf16.mxu0 0
    %843 = vmatpush1.bf16.msra.mxu0 %v628
    %844 = vmatprep.subr.bf16.mxu0 0
    %845 = vmatpush1.bf16.msra.mxu0 %v629
    %846 = vmatprep.mubr.bf16.mxu0 %v174
    %847 = vmatmul.mubr.bf16.gmra.mrb[0].mxu0 %v173
    %v848 = vpop.f32.mrb[0].mxu0
    %v849 = vadd.f32 %v809, %v848
    %v850 = vpop.f32.mrb[0].mxu0
    %v851 = vpop.f32.mrb[0].mxu0
    %v852 = vpop.f32.mrb[0].mxu0
    %853 = vdwg.mxu0
    %v854 = vmax.f32 %v849, 0.0
    %v855 = vlaneseq
    %v856 = vshrl.u32 %v855, 7
    %v857 = vsub.s32 0, %v856
    %v858 = vrot.slane %v119, %v857
    %v859 = vmul.f32 %v854, %v858
    %v860 = vpack.c.bf16 %v859, %v859
    %v861 = vld [vmem:[#allocation10] sm:$0xf]
    %v862 = vld [vmem:[#allocation10 + $0x4] sm:$0xf]
    %v863 = vld [vmem:[#allocation10 + $0x8] sm:$0xf]
    %v864 = vld [vmem:[#allocation10 + $0xc] sm:$0xf]
    %v865 = vld [vmem:[#allocation10 + $0x10] sm:$0xf]
    %v866 = vld [vmem:[#allocation10 + $0x14] sm:$0xf]
    %v867 = vld [vmem:[#allocation10 + $0x18] sm:$0xf]
    %v868 = vld [vmem:[#allocation10 + $0x1c] sm:$0xf]
    %v869 = vld [vmem:[#allocation10 + $0x20] sm:$0xf]
    %v870 = vld [vmem:[#allocation10 + $0x24] sm:$0xf]
    %v871 = vld [vmem:[#allocation10 + $0x28] sm:$0xf]
    %v872 = vld [vmem:[#allocation10 + $0x2c] sm:$0xf]
    %v873 = vld [vmem:[#allocation10 + $0x30] sm:$0xf]
    %v874 = vld [vmem:[#allocation10 + $0x34] sm:$0xf]
    %v875 = vld [vmem:[#allocation10 + $0x38] sm:$0xf]
    %v876 = vld [vmem:[#allocation10 + $0x3c] sm:$0xf]
    %v877 = vld [vmem:[%s5] sm:$0x1]
    %v879 = vlaneseq
    %v880 = vshrl.u32 %v879, 7
    %v881 = vsub.s32 0, %v880
    %v882 = vrot.slane %v877, %v881
    %v900 = vunpack.c.l.b16 %v861
    %v901 = vunpack.c.l.b16 %v862
    %v902 = vunpack.c.l.b16 %v863
    %v903 = vunpack.c.l.b16 %v864
    %v904 = vunpack.c.l.b16 %v865
    %v905 = vunpack.c.l.b16 %v866
    %v906 = vunpack.c.l.b16 %v867
    %v907 = vunpack.c.l.b16 %v868
    %v908 = vunpack.c.l.b16 %v869
    %v909 = vunpack.c.l.b16 %v870
    %v910 = vunpack.c.l.b16 %v871
    %v911 = vunpack.c.l.b16 %v872
    %v912 = vunpack.c.l.b16 %v873
    %v913 = vunpack.c.l.b16 %v874
    %v914 = vunpack.c.l.b16 %v875
    %v915 = vunpack.c.l.b16 %v876
    %v916 = vpack.c.b16 %v901, %v900
    %v917 = vpack.c.b16 %v903, %v902
    %v918 = vpack.c.b16 %v905, %v904
    %v919 = vpack.c.b16 %v907, %v906
    %v920 = vpack.c.b16 %v909, %v908
    %v921 = vpack.c.b16 %v911, %v910
    %v922 = vpack.c.b16 %v913, %v912
    %v923 = vpack.c.b16 %v915, %v914
    %932 = vmatprep.subr.bf16.mxu0 0
    %933 = vmatpush1.bf16.msra.mxu0 %v916
    %934 = vmatprep.subr.bf16.mxu0 0
    %935 = vmatpush1.bf16.msra.mxu0 %v917
    %936 = vmatprep.subr.bf16.mxu0 0
    %937 = vmatpush1.bf16.msra.mxu0 %v918
    %938 = vmatprep.subr.bf16.mxu0 0
    %939 = vmatpush1.bf16.msra.mxu0 %v919
    %940 = vmatprep.subr.bf16.mxu0 0
    %941 = vmatpush1.bf16.msra.mxu0 %v920
    %942 = vmatprep.subr.bf16.mxu0 0
    %943 = vmatpush1.bf16.msra.mxu0 %v921
    %944 = vmatprep.subr.bf16.mxu0 0
    %945 = vmatpush1.bf16.msra.mxu0 %v922
    %946 = vmatprep.subr.bf16.mxu0 0
    %947 = vmatpush1.bf16.msra.mxu0 %v923
    %948 = vmatprep.subr.bf16.mxu0 0
    %949 = vmatpush1.bf16.msra.mxu0 0
    %950 = vmatprep.subr.bf16.mxu0 0
    %951 = vmatpush1.bf16.msra.mxu0 0
    %952 = vmatprep.subr.bf16.mxu0 0
    %953 = vmatpush1.bf16.msra.mxu0 0
    %954 = vmatprep.subr.bf16.mxu0 0
    %955 = vmatpush1.bf16.msra.mxu0 0
    %956 = vmatprep.subr.bf16.mxu0 0
    %957 = vmatpush1.bf16.msra.mxu0 0
    %958 = vmatprep.subr.bf16.mxu0 0
    %959 = vmatpush1.bf16.msra.mxu0 0
    %960 = vmatprep.subr.bf16.mxu0 0
    %961 = vmatpush1.bf16.msra.mxu0 0
    %962 = vmatprep.subr.bf16.mxu0 0
    %963 = vmatpush1.bf16.msra.mxu0 0
    %964 = vmatprep.mubr.bf16.mxu0 0
    %965 = vmatmul.mubr.bf16.gmra.mrb[0].mxu0 %v860
    %v966 = vpop.f32.mrb[0].mxu0
    %v967 = vadd.f32 %v882, %v966
    %v968 = vpop.f32.mrb[0].mxu0
    %v969 = vpop.f32.mrb[0].mxu0
    %v970 = vpop.f32.mrb[0].mxu0
    %971 = vdwg.mxu0
    %v972 = vmax.f32 %v967, 0.0
    %v973 = vlaneseq
    %v974 = vshrl.u32 %v973, 7
    %v975 = vsub.s32 1, %v974
    %v976 = vrot.slane %v119, %v975
    %v977 = vmul.f32 %v972, %v976
    %v978 = vpack.c.bf16 %v977, %v977
    %v979 = vld [vmem:[#allocation11] sm:$0xf]
    %v980 = vld [vmem:[#allocation11 + $0x4] sm:$0xf]
    %v981 = vld [vmem:[#allocation11 + $0x8] sm:$0xf]
    %v982 = vld [vmem:[#allocation11 + $0xc] sm:$0xf]
    %v983 = vld [vmem:[#allocation11 + $0x10] sm:$0xf]
    %v984 = vld [vmem:[#allocation11 + $0x14] sm:$0xf]
    %v985 = vld [vmem:[#allocation11 + $0x18] sm:$0xf]
    %v986 = vld [vmem:[#allocation11 + $0x1c] sm:$0xf]
    %v987 = vld [vmem:[#allocation11 + $0x20] sm:$0xf]
    %v988 = vld [vmem:[#allocation11 + $0x24] sm:$0xf]
    %v989 = vld [vmem:[#allocation11 + $0x28] sm:$0xf]
    %v990 = vld [vmem:[#allocation11 + $0x2c] sm:$0xf]
    %v991 = vld [vmem:[#allocation11 + $0x30] sm:$0xf]
    %v992 = vld [vmem:[#allocation11 + $0x34] sm:$0xf]
    %v993 = vld [vmem:[#allocation11 + $0x38] sm:$0xf]
    %v994 = vld [vmem:[#allocation11 + $0x3c] sm:$0xf]
    %v995 = vld [vmem:[%s8] sm:$0x1]
    %v997 = vlaneseq
    %v998 = vshrl.u32 %v997, 7
    %v999 = vsub.s32 0, %v998
    %v1000 = vrot.slane %v995, %v999
    %v1018 = vunpack.c.l.b16 %v979
    %v1019 = vunpack.c.l.b16 %v980
    %v1020 = vunpack.c.l.b16 %v981
    %v1021 = vunpack.c.l.b16 %v982
    %v1022 = vunpack.c.l.b16 %v983
    %v1023 = vunpack.c.l.b16 %v984
    %v1024 = vunpack.c.l.b16 %v985
    %v1025 = vunpack.c.l.b16 %v986
    %v1026 = vunpack.c.l.b16 %v987
    %v1027 = vunpack.c.l.b16 %v988
    %v1028 = vunpack.c.l.b16 %v989
    %v1029 = vunpack.c.l.b16 %v990
    %v1030 = vunpack.c.l.b16 %v991
    %v1031 = vunpack.c.l.b16 %v992
    %v1032 = vunpack.c.l.b16 %v993
    %v1033 = vunpack.c.l.b16 %v994
    %v1034 = vpack.c.b16 %v1019, %v1018
    %v1035 = vpack.c.b16 %v1021, %v1020
    %v1036 = vpack.c.b16 %v1023, %v1022
    %v1037 = vpack.c.b16 %v1025, %v1024
    %v1038 = vpack.c.b16 %v1027, %v1026
    %v1039 = vpack.c.b16 %v1029, %v1028
    %v1040 = vpack.c.b16 %v1031, %v1030
    %v1041 = vpack.c.b16 %v1033, %v1032
    %1050 = vmatprep.subr.bf16.mxu0 0
    %1051 = vmatpush1.bf16.msra.mxu0 %v1034
    %1052 = vmatprep.subr.bf16.mxu0 0
    %1053 = vmatpush1.bf16.msra.mxu0 %v1035
    %1054 = vmatprep.subr.bf16.mxu0 0
    %1055 = vmatpush1.bf16.msra.mxu0 %v1036
    %1056 = vmatprep.subr.bf16.mxu0 0
    %1057 = vmatpush1.bf16.msra.mxu0 %v1037
    %1058 = vmatprep.subr.bf16.mxu0 0
    %1059 = vmatpush1.bf16.msra.mxu0 %v1038
    %1060 = vmatprep.subr.bf16.mxu0 0
    %1061 = vmatpush1.bf16.msra.mxu0 %v1039
    %1062 = vmatprep.subr.bf16.mxu0 0
    %1063 = vmatpush1.bf16.msra.mxu0 %v1040
    %1064 = vmatprep.subr.bf16.mxu0 0
    %1065 = vmatpush1.bf16.msra.mxu0 %v1041
    %1066 = vmatprep.subr.bf16.mxu0 0
    %1067 = vmatpush1.bf16.msra.mxu0 0
    %1068 = vmatprep.subr.bf16.mxu0 0
    %1069 = vmatpush1.bf16.msra.mxu0 0
    %1070 = vmatprep.subr.bf16.mxu0 0
    %1071 = vmatpush1.bf16.msra.mxu0 0
    %1072 = vmatprep.subr.bf16.mxu0 0
    %1073 = vmatpush1.bf16.msra.mxu0 0
    %1074 = vmatprep.subr.bf16.mxu0 0
    %1075 = vmatpush1.bf16.msra.mxu0 0
    %1076 = vmatprep.subr.bf16.mxu0 0
    %1077 = vmatpush1.bf16.msra.mxu0 0
    %1078 = vmatprep.subr.bf16.mxu0 0
    %1079 = vmatpush1.bf16.msra.mxu0 0
    %1080 = vmatprep.subr.bf16.mxu0 0
    %1081 = vmatpush1.bf16.msra.mxu0 0
    %1082 = vmatprep.mubr.bf16.mxu0 0
    %1083 = vmatmul.mubr.bf16.gmra.mrb[0].mxu0 %v978
    %v1084 = vpop.f32.mrb[0].mxu0
    %v1085 = vadd.f32 %v1000, %v1084
    %v1086 = vpop.f32.mrb[0].mxu0
    %v1087 = vpop.f32.mrb[0].mxu0
    %v1088 = vpop.f32.mrb[0].mxu0
    %1089 = vdwg.mxu0
    %1090 = vst [vmem:[#allocation13] sm:$0x3] %v1085
    // Predicated region
    $region54: #{tpu_custom_call.1} parent=1 // pred_check
      _
    $region55: #{tpu_custom_call.1} parent=1 // pred_check_branch
      %1092 = sbr.rel (0) target = $region57
    $region56: #{tpu_custom_call.1} parent=1 // pred_region
      %s1094 = ssub.s32 32, 32
      %1095 = vsyncadd [#allocation7], %s1094
      %s1097 = sshll.u32 [#allocation13], 4
      %s1098 = int_to_ptr.vmem [resolvable:$true] %s1097
      %1100 = dma.vmem_to_hbm [thread:$0]  %s1098, 32, %s10, [#allocation7]
    $region57: #{tpu_custom_call.1} parent=1 // pred_fallthru
      _
    // Predicated region
    $region58: #{tpu_custom_call.1} parent=1 // pred_check
      _
    $region59: #{tpu_custom_call.1} parent=1 // pred_check_branch
      %1102 = sbr.rel (0) target = $region61
    $region60: #{tpu_custom_call.1} parent=1 // pred_region
      %s1104 = ssub.s32 32, 32
      %1105 = vsyncadd [#allocation15], %s1104
      %s1107 = sshll.u32 [#allocation14], 4
      %s1108 = int_to_ptr.vmem [resolvable:$true] %s1107
      %1110 = dma.vmem_to_hbm [thread:$0]  %s1108, 32, %s11, [#allocation15]
    $region61: #{tpu_custom_call.1} parent=1 // pred_fallthru
      _
    // Predicated region
    $region62: #{tpu_custom_call.1} parent=1 // pred_check
      _
    $region63: #{tpu_custom_call.1} parent=1 // pred_check_branch
      %1112 = sbr.rel (0) target = $region65
    $region64: #{tpu_custom_call.1} parent=1 // pred_region
      %1113 = dma.done [#allocation7], 32
    $region65: #{tpu_custom_call.1} parent=1 // pred_fallthru
      _
    // Predicated region
    $region66: #{tpu_custom_call.1} parent=1 // pred_check
      _
    $region67: #{tpu_custom_call.1} parent=1 // pred_check_branch
      %1115 = sbr.rel (0) target = $region69
    $region68: #{tpu_custom_call.1} parent=1 // pred_region
      %1116 = dma.done [#allocation15], 32
    $region69: #{tpu_custom_call.1} parent=1 // pred_fallthru
      _
    %1117 = vsyncpa [#allocation6], 1
    %1118 = vsyncpa [#allocation9], 1
    %1119 = vsyncpa [#allocation12], 1
    %1120 = vsyncpa [#allocation7], 1
    %1121 = vsyncpa [#allocation15], 1

</llo_original>
